<compile_context>
chip_gen: v5e
topology: v5e:2x2
jax: 0.10.0
libtpu: 0.0.40
codegen_flags: <defaults>
</compile_context>

<pallas_src>
import functools

import jax
import jax.numpy as jnp
from jax.experimental import pallas as pl
from jax.experimental.pallas import tpu as pltpu


_LANES = 128                        # vreg lane width
_SUBLANES = 8                       # f32 vreg sublane count
_NCORES = 2                         # leading "parallel" axis (v7x megacore; loop elsewhere)
_MAX_BLOCK_BYTES = 2 * 1024 * 1024  # per operand per pipeline buffer (~roofline tiles)


def _cdiv(a, b):
    return -(-a // b)


def _round_up(x, m):
    return _cdiv(x, m) * m


# ----------------------------- Pallas kernel ------------------------------

def _l1_partial_kernel(a_ref, b_ref, o_ref, *, rows, tr, tiles_per_core, mask_needed):
    """Streaming |a - b| partial-sum kernel.

    a_ref / b_ref : (tr, 128) tiles of the flattened operands (native dtype).
    o_ref         : (8, 128) f32 per-core-slice partial sums. Its block index
                    is constant along the reduction axis, so it stays resident
                    in VMEM and is written back once per core slice.
    """
    c = pl.program_id(0)   # core slice (parallel)
    i = pl.program_id(1)   # streaming / reduction step (arbitrary)

    @pl.when(i == 0)
    def _():
        o_ref[...] = jnp.zeros_like(o_ref)

    # Upcast in-register: HBM traffic stays at the native dtype width.
    d = jnp.abs(a_ref[...].astype(jnp.float32) - b_ref[...].astype(jnp.float32))

    def fold(x):
        # (tr,128) -> (8,128): pure VPU adds; all cross-lane/XLU work is
        # deferred to the tiny wrapper-side epilogue.
        return jnp.sum(x.reshape(tr // _SUBLANES, _SUBLANES, _LANES), axis=0)

    if mask_needed:
        tile = c * tiles_per_core + i              # global (unclamped) row-tile index
        in_bounds = (tile + 1) * tr <= rows

        @pl.when(in_bounds)
        def _():
            o_ref[...] += fold(d)

        @pl.when(jnp.logical_not(in_bounds))
        def _():
            # Ragged / phantom tile: zero every row whose global index >= rows.
            row_ids = tile * tr + jax.lax.broadcasted_iota(jnp.int32, d.shape, 0)
            o_ref[...] += fold(jnp.where(row_ids < rows, d, 0.0))
    else:
        o_ref[...] += fold(d)


# ----------------------------- wrapper -------------------------------------

def ssim_loss_forward(sr, hr):
    """Forward pass of SSIMLoss: nn.L1Loss()(SR, HR) -> scalar mean(|SR - HR|)."""
    assert sr.shape == hr.shape, (sr.shape, hr.shape)
    n = sr.size

    a = sr.reshape(-1)
    b = hr.reshape(-1)

    # Lane-dense (rows, 128) view. Pad only when n is not a multiple of 128
    # (<= 127 zeros; |0 - 0| = 0 and we divide by the true n, so it is exact).
    n_lanes = _round_up(n, _LANES)
    if n_lanes != n:
        a = jnp.pad(a, (0, n_lanes - n))
        b = jnp.pad(b, (0, n_lanes - n))
    rows = n_lanes // _LANES

    # Row tile: largest dtype-aligned tile within the per-buffer byte budget.
    itemsize = jnp.dtype(a.dtype).itemsize
    row_align = _SUBLANES * max(1, 4 // itemsize)        # 8 (f32) / 16 (bf16) / 32 (i8)
    max_rows = max(row_align,
                   (_MAX_BLOCK_BYTES // (_LANES * itemsize)) // row_align * row_align)
    tr = min(max_rows, _round_up(rows, row_align))

    nt = _cdiv(rows, tr)                    # total row tiles
    ncores = min(_NCORES, nt)               # don't split a single tile
    tiles_per_core = _cdiv(nt, ncores)
    # Any tile that can spill past `rows` (ragged last tile or phantom tile
    # from an odd split) must be zero-masked inside the kernel.
    mask_needed = (ncores * tiles_per_core * tr != rows)

    if ncores * tiles_per_core == nt:
        def in_map(c, i):
            return (c * tiles_per_core + i, 0)
    else:
        def in_map(c, i):
            # Clamp phantom tiles into bounds; their contribution is zero-masked.
            return (jnp.minimum(c * tiles_per_core + i, nt - 1), 0)

    kernel = functools.partial(
        _l1_partial_kernel, rows=rows, tr=tr,
        tiles_per_core=tiles_per_core, mask_needed=mask_needed)

    partials = pl.pallas_call(
        kernel,
        out_shape=jax.ShapeDtypeStruct((ncores * _SUBLANES, _LANES), jnp.float32),
        grid_spec=pltpu.PrefetchScalarGridSpec(
            num_scalar_prefetch=0,
            grid=(ncores, tiles_per_core),
            in_specs=[
                pl.BlockSpec((tr, _LANES), in_map),
                pl.BlockSpec((tr, _LANES), in_map),
            ],
            out_specs=pl.BlockSpec((_SUBLANES, _LANES), lambda c, i: (c, 0)),
        ),
        compiler_params=pltpu.CompilerParams(
            dimension_semantics=("parallel", "arbitrary"),
        ),
    )(a.reshape(rows, _LANES), b.reshape(rows, _LANES))

    # Tiny epilogue (<= 2 KiB): cross-core + cross-sublane/lane reduce + mean.
    return jnp.sum(partials) / n


# TODO(synk): the OCR-model loading/prediction, cv2/PIL padding & resize and
# levenshtein helpers of SSIMLoss are host-side utilities never used inside
# forward(); they have no Pallas equivalent and are omitted.


# ----------------------------- main ----------------------------------------

if __name__ == "__main__":
    key = jax.random.PRNGKey(0)
    k1, k2 = jax.random.split(key)

    N, C, H, W = 2, 4, 16, 16
    SR = jax.random.uniform(k1, (N, C, H, W), jnp.float32)
    HR = jax.random.uniform(k2, (N, C, H, W), jnp.float32)

    loss = jax.jit(ssim_loss_forward)(SR, HR)
    loss = jax.block_until_ready(loss)

    ref = jnp.mean(jnp.abs(SR - HR))
    assert loss.shape == (), loss.shape
    assert bool(jnp.isfinite(loss))
    assert abs(float(loss) - float(ref)) < 1e-5, (float(loss), float(ref))
    print("KERNEL_OK")
</pallas_src>

<mosaic_0001>
module attributes {stable_mosaic.version = 11 : i64} {
  func.func @_l1_partial_kernel(%arg0: i32, %arg1: i32, %arg2: memref<16x128xf32, #tpu.memory_space<vmem>>, %arg3: memref<16x128xf32, #tpu.memory_space<vmem>>, %arg4: memref<8x128xf32, #tpu.memory_space<vmem>>) attributes {dimension_semantics = [#tpu.dimension_semantics<parallel>, #tpu.dimension_semantics<arbitrary>], iteration_bounds = array<i64: 1, 1>, scalar_prefetch = 0 : i64, scratch_operands = 0 : i64, tpu.core_type = #tpu.core_type<tc>, window_params = [{transform_indices = @transform_0, window_bounds = array<i64: 16, 128>}, {transform_indices = @transform_1, window_bounds = array<i64: 16, 128>}, {transform_indices = @transform_2, window_bounds = array<i64: 8, 128>}]} {
    %c0_i32 = arith.constant 0 : i32
    %0 = arith.cmpi eq, %arg1, %c0_i32 : i32
    %1 = arith.extui %0 : i1 to i32
    %c0_i32_0 = arith.constant 0 : i32
    %2 = arith.cmpi ne, %1, %c0_i32_0 : i32
    scf.if %2 {
      %cst_8 = arith.constant 0.000000e+00 : f32
      %12 = vector.broadcast %cst_8 : f32 to vector<8x128xf32>
      %c0_9 = arith.constant 0 : index
      %c0_10 = arith.constant 0 : index
      %13 = vector.load %arg4[%c0_9, %c0_10] : memref<8x128xf32, #tpu.memory_space<vmem>>, vector<8x128xf32>
      tpu.vector_store %arg4[%c0_9, %c0_10], %12 {strides = array<i32>} : memref<8x128xf32, #tpu.memory_space<vmem>>, vector<8x128xf32>,
    } else {
    }
    %c0 = arith.constant 0 : index
    %c0_1 = arith.constant 0 : index
    %3 = vector.load %arg2[%c0, %c0_1] : memref<16x128xf32, #tpu.memory_space<vmem>>, vector<16x128xf32>
    %c0_2 = arith.constant 0 : index
    %c0_3 = arith.constant 0 : index
    %4 = vector.load %arg3[%c0_2, %c0_3] : memref<16x128xf32, #tpu.memory_space<vmem>>, vector<16x128xf32>
    %5 = arith.subf %3, %4 : vector<16x128xf32>
    %6 = math.absf %5 : vector<16x128xf32>
    %c0_4 = arith.constant 0 : index
    %c0_5 = arith.constant 0 : index
    %7 = vector.load %arg4[%c0_4, %c0_5] : memref<8x128xf32, #tpu.memory_space<vmem>>, vector<8x128xf32>
    %8 = vector.shape_cast %6 : vector<16x128xf32> to vector<2x8x128xf32>
    %cst = arith.constant dense<0.000000e+00> : vector<8x128xf32>
    %9 = vector.multi_reduction <add>, %8, %cst [0] : vector<2x8x128xf32> to vector<8x128xf32>
    %10 = arith.addf %7, %9 : vector<8x128xf32>
    %c0_6 = arith.constant 0 : index
    %c0_7 = arith.constant 0 : index
    %11 = vector.load %arg4[%c0_6, %c0_7] : memref<8x128xf32, #tpu.memory_space<vmem>>, vector<8x128xf32>
    tpu.vector_store %arg4[%c0_6, %c0_7], %10 {strides = array<i32>} : memref<8x128xf32, #tpu.memory_space<vmem>>, vector<8x128xf32>,
    return
  }
  func.func @transform_0(%arg0: i32, %arg1: i32) -> (i32, i32) {
    %c1_i32 = arith.constant 1 : i32
    %0 = arith.muli %arg0, %c1_i32 : i32
    %1 = arith.addi %0, %arg1 : i32
    %c0_i32 = arith.constant 0 : i32
    %c0_i32_0 = arith.constant 0 : i32
    return %1, %c0_i32 : i32, i32
  }
  func.func @transform_1(%arg0: i32, %arg1: i32) -> (i32, i32) {
    %c1_i32 = arith.constant 1 : i32
    %0 = arith.muli %arg0, %c1_i32 : i32
    %1 = arith.addi %0, %arg1 : i32
    %c0_i32 = arith.constant 0 : i32
    %c0_i32_0 = arith.constant 0 : i32
    return %1, %c0_i32 : i32, i32
  }
  func.func @transform_2(%arg0: i32, %arg1: i32) -> (i32, i32) {
    %c0_i32 = arith.constant 0 : i32
    %c0_i32_0 = arith.constant 0 : i32
    return %arg0, %c0_i32 : i32, i32
  }
}

</mosaic_0001>

<llo_original>
// kernel: ssim_loss_forward.1
$region0: #{ssim_loss_forward.1}
  #allocation0 [shape = 'u32[]', space=smem, size = 0x4, offset = 0x4, fixed_abs, tag = 'smem constant byte address 0x4 - core index']
  #allocation1 [shape = 'u32[72,128]{1,0:T(1,128)}', space=vmem, size = 0x9000, scoped, tag = 'internal scratch']
  %s0 = inlined_call_operand.vmem [shape: f32[16,128], index: 0, kind: input, shape index: {}]
  %s1 = inlined_call_operand.vmem [shape: f32[16,128], index: 1, kind: input, shape index: {}]
  %s2 = inlined_call_operand.vmem [shape: f32[8,128], index: 2, kind: output, shape index: {}]
  %s3 = sld [smem:[#allocation0]]
  $region22: #{ssim_loss_forward.1} parent=0
    _
  %s5 = ssub.s32 1, %s3
  %s6 = scalar_select 0, %s5, %s3
  // Predicated region
  $region2: #{ssim_loss_forward.1} parent=0 // pred_check
    _
  $region3: #{ssim_loss_forward.1} parent=0 // pred_check_branch
    %8 = sbr.rel (0) target = $region5
  $region4: #{ssim_loss_forward.1} parent=0 // pred_region
    %s9 = sadd.s32 0, 0
    %s10 = smul.u32 2, %s9
    %p11 = scmp.lt.s32.totalorder %s10, 1
    %s12 = scalar_select %p11, %s10, 1
    %s13 = smul.addr %s12, 8
    %s14 = scalar_lea.vmem %s0, %s13
    %s15 = sadd.s32 0, 0
    %s16 = smul.u32 2, %s15
  $region5: #{ssim_loss_forward.1} parent=0 // pred_fallthru
    _
  // Predicated region
  $region6: #{ssim_loss_forward.1} parent=0 // pred_check
    _
  $region7: #{ssim_loss_forward.1} parent=0 // pred_check_branch
    %18 = sbr.rel (0) target = $region9
  $region8: #{ssim_loss_forward.1} parent=0 // pred_region
    %s19 = sadd.s32 0, 0
    %s20 = smul.u32 2, %s19
    %p21 = scmp.lt.s32.totalorder %s20, 1
    %s22 = scalar_select %p21, %s20, 1
    %s23 = smul.addr %s22, 8
    %s24 = scalar_lea.vmem %s1, %s23
    %s25 = sadd.s32 0, 0
    %s26 = smul.u32 2, %s25
  $region9: #{ssim_loss_forward.1} parent=0 // pred_fallthru
    _
  %s27 = sadd.s32 0, 0
  %s28 = smul.u32 2, %s27
  %p29 = scmp.lt.s32.totalorder %s28, 1
  %s30 = scalar_select %p29, %s28, 1
  %s31 = smul.addr %s30, 8
  %s32 = scalar_lea.vmem %s0, %s31
  %s33 = sadd.s32 0, 0
  %s34 = smul.u32 2, %s33
  %p35 = scmp.lt.s32.totalorder %s34, 1
  %s36 = scalar_select %p35, %s34, 1
  %s37 = smul.addr %s36, 8
  %s38 = scalar_lea.vmem %s1, %s37
  %s39 = sadd.s32 0, 0
  %s40 = smul.u32 2, %s39
  %p41 = scmp.lt.s32.totalorder %s40, 1
  %s42 = scalar_select %p41, %s40, 1
  %s43 = smul.addr %s42, 8
  %s44 = scalar_lea.vmem %s0, %s43
  %s45 = sadd.s32 0, 0
  %s46 = smul.u32 2, %s45
  %s47 = sadd.s32 0, 0
  %s48 = smul.u32 2, %s47
  %p49 = scmp.lt.s32.totalorder %s48, 1
  %s50 = scalar_select %p49, %s48, 1
  %s51 = smul.addr %s50, 8
  %s52 = scalar_lea.vmem %s1, %s51
  %s53 = sadd.s32 0, 0
  %s54 = smul.u32 2, %s53
  %p55 = scmp.eq.s32.totalorder 0, 0
  // Predicated region
  $region10: #{ssim_loss_forward.1} parent=0 // pred_check
    %p56 = pneg %p55
  $region11: #{ssim_loss_forward.1} parent=0 // pred_check_branch
    %58 = sbr.rel (%p56) target = $region13
  $region12: #{ssim_loss_forward.1} parent=0 // pred_region
    %59 = vst [vmem:[%s2] sm:$0xff] 0.0
  $region13: #{ssim_loss_forward.1} parent=0 // pred_fallthru
    _
  %v60 = vld [vmem:[%s44] sm:$0xff]
  %v61 = vld [vmem:[%s44 + $0x8] sm:$0xff]
  %v62 = vld [vmem:[%s52] sm:$0xff]
  %v63 = vld [vmem:[%s52 + $0x8] sm:$0xff]
  %v64 = vsub.f32 %v60, %v62
  %v65 = vsub.f32 %v61, %v63
  %v66 = vand.u32 2147483647, %v64
  %v67 = vand.u32 2147483647, %v65
  %v68 = vld [vmem:[%s2] sm:$0xff]
  %v69 = vadd.f32 %v66, %v67
  %v70 = vadd.f32 %v68, %v69
  %71 = vst [vmem:[%s2] sm:$0xff] %v70
  // Predicated region
  $region14: #{ssim_loss_forward.1} parent=0 // pred_check
    _
  $region15: #{ssim_loss_forward.1} parent=0 // pred_check_branch
    %73 = sbr.rel (0) target = $region17
  $region16: #{ssim_loss_forward.1} parent=0 // pred_region
    _
  $region17: #{ssim_loss_forward.1} parent=0 // pred_fallthru
    _
  // Predicated region
  $region18: #{ssim_loss_forward.1} parent=0 // pred_check
    _
  $region19: #{ssim_loss_forward.1} parent=0 // pred_check_branch
    %75 = sbr.rel (0) target = $region21
  $region20: #{ssim_loss_forward.1} parent=0 // pred_region
    _
  $region21: #{ssim_loss_forward.1} parent=0 // pred_fallthru
    _

</llo_original>
